<compile_context>
chip_gen: v5e
topology: v5e:2x2
jax: 0.10.0
libtpu: 0.0.40
codegen_flags: <defaults>
</compile_context>

<pallas_src>
import jax
import jax.numpy as jnp
from jax.experimental import pallas as pl
from jax.experimental.pallas import tpu as pltpu


def _round_up(n, m):
    return ((n + m - 1) // m) * m


def mlp_kernel(x_ref, w1t_ref, b1_ref, w2t_ref, b2_ref, o_ref):
    # linear1: (TB, In) @ (In, H) on the MXU, bf16 operands, f32 accumulator.
    x = x_ref[...].astype(jnp.bfloat16)
    h = jnp.dot(x, w1t_ref[...], preferred_element_type=jnp.float32)
    # bias + ReLU fused in one f32 VPU pass.
    h = jnp.maximum(h + b1_ref[...], 0.0)
    # linear2: (TB, H) @ (H, C) on the MXU, bf16 operands, f32 accumulator.
    out = jnp.dot(h.astype(jnp.bfloat16), w2t_ref[...],
                  preferred_element_type=jnp.float32)
    # Direct (TB, C) f32 store: 16x less writeback than the padded slab.
    o_ref[...] = (out + b2_ref[...]).astype(o_ref.dtype)


def prepare_params(w1, b1, w2, b2):
    """One-time parameter prep (call once at init, NOT per forward call).

    w1: (hidden, in)   PyTorch nn.Linear layout    b1: (hidden,)
    w2: (classes, hidden)                          b2: (classes,)

    Returns kernel-ready tensors (no padding; all used as full-array blocks):
      w1t: (in, hidden)      bf16     b1r: (1, hidden)   f32
      w2t: (hidden, classes) bf16     b2r: (1, classes)  f32
    """
    w1t = jnp.asarray(w1).T.astype(jnp.bfloat16)
    b1r = jnp.asarray(b1).reshape(1, -1).astype(jnp.float32)
    w2t = jnp.asarray(w2).T.astype(jnp.bfloat16)
    b2r = jnp.asarray(b2).reshape(1, -1).astype(jnp.float32)
    return w1t, b1r, w2t, b2r


def neural_net2_forward(x, params, *, tile_b=1024):
    """NeuralNet2 forward: logits = linear2(relu(linear1(x)))."""
    w1t, b1r, w2t, b2r = params
    B, in_sz = x.shape
    hid = w1t.shape[1]
    ncls = w2t.shape[1]

    cost = pl.CostEstimate(
        flops=2 * B * (in_sz * hid + hid * ncls),
        transcendentals=0,
        bytes_accessed=(x.size * x.dtype.itemsize
                        + w1t.size * 2 + w2t.size * 2
                        + b1r.size * 4 + b2r.size * 4
                        + B * ncls * 4),
    )
    out_shape = jax.ShapeDtypeStruct((B, ncls), jnp.float32)
    weight_bytes = w1t.size * 2 + b1r.size * 4 + w2t.size * 2 + b2r.size * 4

    if B <= tile_b:
        # Single full-array block: no grid, no per-step pipeline overhead.
        vmem_limit = min(
            4 * (B * in_sz * x.dtype.itemsize + B * ncls * 4)
            + 4 * weight_bytes + (2 << 20),
            48 << 20)
        return pl.pallas_call(
            mlp_kernel,
            out_shape=out_shape,
            compiler_params=pltpu.CompilerParams(
                vmem_limit_bytes=int(vmem_limit)),
            cost_estimate=cost,
        )(x, w1t, b1r, w2t, b2r)

    # Gridded path: pipeline over the batch only; weights stay VMEM-resident.
    steps = pl.cdiv(B, tile_b)
    if steps % 2 == 1:
        # Even step count so v7x's two TensorCores split the batch evenly
        # (free on v5e/v6e which have a single TensorCore).
        tile_b = _round_up(pl.cdiv(B, steps + 1), 8)
        steps = pl.cdiv(B, tile_b)

    tile_bytes = tile_b * in_sz * x.dtype.itemsize + tile_b * ncls * 4
    vmem_limit = min(4 * tile_bytes + 4 * weight_bytes + (4 << 20), 48 << 20)

    return pl.pallas_call(
        mlp_kernel,
        out_shape=out_shape,
        grid=(steps,),
        in_specs=[
            pl.BlockSpec((tile_b, in_sz), lambda i: (i, 0)),
            pl.BlockSpec((in_sz, hid), lambda i: (0, 0)),
            pl.BlockSpec((1, hid), lambda i: (0, 0)),
            pl.BlockSpec((hid, ncls), lambda i: (0, 0)),
            pl.BlockSpec((1, ncls), lambda i: (0, 0)),
        ],
        out_specs=pl.BlockSpec((tile_b, ncls), lambda i: (i, 0)),
        compiler_params=pltpu.CompilerParams(
            dimension_semantics=("parallel",),
            vmem_limit_bytes=int(vmem_limit)),
        cost_estimate=cost,
    )(x, w1t, b1r, w2t, b2r)


def _reference(x, w1, b1, w2, b2):
    # Matches the kernel's numeric contract: bf16 MXU operands, f32 accum.
    xb, w1b, w2b = (t.astype(jnp.bfloat16) for t in (x, w1, w2))
    h = jnp.maximum(
        jnp.dot(xb, w1b.T, preferred_element_type=jnp.float32) + b1, 0.0)
    return jnp.dot(h.astype(jnp.bfloat16), w2b.T,
                   preferred_element_type=jnp.float32) + b2


if __name__ == "__main__":
    # Shapes consistent with the module: input_size=32, hidden=64,
    # num_classes=8, small batch=8.
    B, IN, HID, NCLS = 8, 32, 64, 8

    key = jax.random.PRNGKey(0)
    kx, kw1, kb1, kw2, kb2, kx2 = jax.random.split(key, 6)

    x = jax.random.normal(kx, (B, IN), dtype=jnp.float32)

    lim1 = 1.0 / (IN ** 0.5)
    lim2 = 1.0 / (HID ** 0.5)
    w1 = jax.random.uniform(kw1, (HID, IN), minval=-lim1, maxval=lim1,
                            dtype=jnp.float32)
    b1 = jax.random.uniform(kb1, (HID,), minval=-lim1, maxval=lim1,
                            dtype=jnp.float32)
    w2 = jax.random.uniform(kw2, (NCLS, HID), minval=-lim2, maxval=lim2,
                            dtype=jnp.float32)
    b2 = jax.random.uniform(kb2, (NCLS,), minval=-lim2, maxval=lim2,
                            dtype=jnp.float32)

    params = prepare_params(w1, b1, w2, b2)   # one-time parameter prep

    # --- small batch: single-block path ---
    out = jax.block_until_ready(neural_net2_forward(x, params))
    assert out.shape == (B, NCLS)
    ref = _reference(x, w1, b1, w2, b2)
    assert jnp.allclose(out, ref, atol=1e-4, rtol=1e-4), \
        float(jnp.max(jnp.abs(out - ref)))
    # Loose sanity check against pure-f32 math.
    ref32 = jnp.maximum(x @ w1.T + b1, 0.0) @ w2.T + b2
    assert jnp.allclose(out, ref32, atol=5e-2, rtol=5e-2)

    # --- ragged batch: gridded cdiv path (B not a multiple of tile_b) ---
    B2 = 300
    x2 = jax.random.normal(kx2, (B2, IN), dtype=jnp.float32)
    out2 = jax.block_until_ready(neural_net2_forward(x2, params, tile_b=128))
    assert out2.shape == (B2, NCLS)
    ref2 = _reference(x2, w1, b1, w2, b2)
    assert jnp.allclose(out2, ref2, atol=1e-4, rtol=1e-4), \
        float(jnp.max(jnp.abs(out2 - ref2)))

    print("KERNEL_OK")
</pallas_src>

<mosaic_0001>
module attributes {stable_mosaic.version = 11 : i64} {
  func.func @mlp_kernel(%arg0: memref<8x32xf32, #tpu.memory_space<vmem>>, %arg1: memref<32x64xbf16, #tpu.memory_space<vmem>>, %arg2: memref<1x64xf32, #tpu.memory_space<vmem>>, %arg3: memref<64x8xbf16, #tpu.memory_space<vmem>>, %arg4: memref<1x8xf32, #tpu.memory_space<vmem>>, %arg5: memref<8x8xf32, #tpu.memory_space<vmem>>) attributes {dimension_semantics = [], scalar_prefetch = 0 : i64, scratch_operands = 0 : i64, tpu.core_type = #tpu.core_type<tc>} {
    %c0 = arith.constant 0 : index
    %c0_0 = arith.constant 0 : index
    %0 = vector.load %arg0[%c0, %c0_0] : memref<8x32xf32, #tpu.memory_space<vmem>>, vector<8x32xf32>
    %1 = arith.truncf %0 : vector<8x32xf32> to vector<8x32xbf16>
    %c0_1 = arith.constant 0 : index
    %c0_2 = arith.constant 0 : index
    %2 = vector.load %arg1[%c0_1, %c0_2] : memref<32x64xbf16, #tpu.memory_space<vmem>>, vector<32x64xbf16>
    %cst = arith.constant dense<0.000000e+00> : vector<8x64xf32>
    %3 = tpu.matmul %1, %2, %cst {dimension_numbers = #tpu.dot_dimension_numbers<[1], [0], [0], [1], [0, 0, 1, 1], [], []>} : vector<8x32xbf16>, vector<32x64xbf16>, vector<8x64xf32> -> vector<8x64xf32>
    %c0_3 = arith.constant 0 : index
    %c0_4 = arith.constant 0 : index
    %4 = vector.load %arg2[%c0_3, %c0_4] : memref<1x64xf32, #tpu.memory_space<vmem>>, vector<1x64xf32>
    %5 = vector.broadcast %4 : vector<1x64xf32> to vector<8x64xf32>
    %6 = arith.addf %3, %5 : vector<8x64xf32>
    %cst_5 = arith.constant 0.000000e+00 : f32
    %7 = vector.broadcast %cst_5 : f32 to vector<8x64xf32>
    %8 = arith.maximumf %6, %7 : vector<8x64xf32>
    %9 = arith.truncf %8 : vector<8x64xf32> to vector<8x64xbf16>
    %c0_6 = arith.constant 0 : index
    %c0_7 = arith.constant 0 : index
    %10 = vector.load %arg3[%c0_6, %c0_7] : memref<64x8xbf16, #tpu.memory_space<vmem>>, vector<64x8xbf16>
    %cst_8 = arith.constant dense<0.000000e+00> : vector<8x8xf32>
    %11 = tpu.matmul %9, %10, %cst_8 {dimension_numbers = #tpu.dot_dimension_numbers<[1], [0], [0], [1], [0, 0, 1, 1], [], []>} : vector<8x64xbf16>, vector<64x8xbf16>, vector<8x8xf32> -> vector<8x8xf32>
    %c0_9 = arith.constant 0 : index
    %c0_10 = arith.constant 0 : index
    %12 = vector.load %arg4[%c0_9, %c0_10] : memref<1x8xf32, #tpu.memory_space<vmem>>, vector<1x8xf32>
    %13 = vector.broadcast %12 : vector<1x8xf32> to vector<8x8xf32>
    %14 = arith.addf %11, %13 : vector<8x8xf32>
    %c0_11 = arith.constant 0 : index
    %c0_12 = arith.constant 0 : index
    %15 = vector.load %arg5[%c0_11, %c0_12] : memref<8x8xf32, #tpu.memory_space<vmem>>, vector<8x8xf32>
    tpu.vector_store %arg5[%c0_11, %c0_12], %14 {strides = array<i32>} : memref<8x8xf32, #tpu.memory_space<vmem>>, vector<8x8xf32>,
    return
  }
}

</mosaic_0001>

<llo_original>
// kernel: tpu_custom_call.1
$region0: #{tpu_custom_call.1}
  #allocation0 [shape = 'u32[]', space=smem, size = 0x4, offset = 0x4, fixed_abs, tag = 'smem constant byte address 0x4 - core index']
  #allocation1 [shape = 'u32[72,128]{1,0:T(1,128)}', space=vmem, size = 0x9000, scoped, tag = 'internal scratch']
  %s0 = inlined_call_operand.vmem [shape: f32[8,32], index: 0, kind: input, shape index: {}]
  %s1 = inlined_call_operand.vmem [shape: bf16[32,64], index: 1, kind: input, shape index: {}]
  %s2 = inlined_call_operand.vmem [shape: f32[1,64], index: 2, kind: input, shape index: {}]
  %s3 = inlined_call_operand.vmem [shape: bf16[64,8], index: 3, kind: input, shape index: {}]
  %s4 = inlined_call_operand.vmem [shape: f32[1,8], index: 4, kind: input, shape index: {}]
  %s5 = inlined_call_operand.hbm [shape: f32[8,8], index: 5, kind: output, shape index: {}]
  %s6 = sld [smem:[#allocation0]]
  $region30: #{tpu_custom_call.1} parent=0
    _
  %s8 = ssub.s32 1, %s6
  %s9 = scalar_select 0, %s8, %s6
  $region1: #{tpu_custom_call.1} parent=0
    #allocation2 [shape = 'u8[4096]{0}', space=vmem, size = 0x1000, scoped, tag = 'output window, operand 0, single buffered']
    #allocation3 [shape = 's32[1]{0}', space=sflag, size = 0x4, scoped, tag = 'scoped memory for tpu_custom_call.1']
    %10 = vsyncpa [#allocation3], 0
    // Predicated region
    $region2: #{tpu_custom_call.1} parent=1 // pred_check
      _
    $region3: #{tpu_custom_call.1} parent=1 // pred_check_branch
      %12 = sbr.rel (0) target = $region5
    $region4: #{tpu_custom_call.1} parent=1 // pred_region
      _
    $region5: #{tpu_custom_call.1} parent=1 // pred_fallthru
      _
    // Predicated region
    $region6: #{tpu_custom_call.1} parent=1 // pred_check
      _
    $region7: #{tpu_custom_call.1} parent=1 // pred_check_branch
      %14 = sbr.rel (0) target = $region9
    $region8: #{tpu_custom_call.1} parent=1 // pred_region
      _
    $region9: #{tpu_custom_call.1} parent=1 // pred_fallthru
      _
    // Predicated region
    $region10: #{tpu_custom_call.1} parent=1 // pred_check
      _
    $region11: #{tpu_custom_call.1} parent=1 // pred_check_branch
      %16 = sbr.rel (0) target = $region13
    $region12: #{tpu_custom_call.1} parent=1 // pred_region
      _
    $region13: #{tpu_custom_call.1} parent=1 // pred_fallthru
      _
    // Predicated region
    $region14: #{tpu_custom_call.1} parent=1 // pred_check
      _
    $region15: #{tpu_custom_call.1} parent=1 // pred_check_branch
      %18 = sbr.rel (0) target = $region17
    $region16: #{tpu_custom_call.1} parent=1 // pred_region
      _
    $region17: #{tpu_custom_call.1} parent=1 // pred_fallthru
      _
    // Predicated region
    $region18: #{tpu_custom_call.1} parent=1 // pred_check
      _
    $region19: #{tpu_custom_call.1} parent=1 // pred_check_branch
      %20 = sbr.rel (0) target = $region21
    $region20: #{tpu_custom_call.1} parent=1 // pred_region
      _
    $region21: #{tpu_custom_call.1} parent=1 // pred_fallthru
      _
    %v22 = vld [vmem:[%s0] sm:$0xff]
    %v23 = vpack.c.bf16 %v22, %v22
    %v24 = vld [vmem:[%s1] sm:$0xf]
    %v25 = vld [vmem:[%s1 + $0x4] sm:$0xf]
    %v26 = vld [vmem:[%s1 + $0x8] sm:$0xf]
    %v27 = vld [vmem:[%s1 + $0xc] sm:$0xf]
    %v28 = vld [vmem:[%s2] sm:$0x1]
    %v30 = vperm.slane %v28, 0
    %v36 = vunpack.c.l.b16 %v24
    %v37 = vunpack.c.l.b16 %v25
    %v38 = vunpack.c.l.b16 %v26
    %v39 = vunpack.c.l.b16 %v27
    %v40 = vpack.c.b16 %v37, %v36
    %v41 = vpack.c.b16 %v39, %v38
    %vm44 = vcmask 261120
    %v46 = vsel %vm44, %v23, 0
    %48 = vmatpush.bf16.msra.mxu0 0
    %49 = vmatpush.bf16.msra.mxu0 0
    %50 = vmatpush.bf16.msra.mxu0 0
    %51 = vmatpush.bf16.msra.mxu0 0
    %52 = vmatpush.bf16.msra.mxu0 0
    %53 = vmatpush.bf16.msra.mxu0 0
    %54 = vmatpush.bf16.msra.mxu0 %v41
    %55 = vmatpush.bf16.msra.mxu0 %v40
    %56 = vmatmul.bf16.gmra.mxu0 %v46
    %v57 = vpop.f32.mrf.mxu0
    %v58 = vadd.f32 %v30, %v57
    %v59 = vpop.f32.mrf.mxu0
    %60 = vdwg.mxu0
    %v61 = vmax.f32 %v58, 0.0
    %v62 = vpack.c.bf16 %v61, %v61
    %v63 = vld [vmem:[%s3] sm:$0xf]
    %v64 = vld [vmem:[%s3 + $0x4] sm:$0xf]
    %v65 = vld [vmem:[%s3 + $0x8] sm:$0xf]
    %v66 = vld [vmem:[%s3 + $0xc] sm:$0xf]
    %v67 = vld [vmem:[%s3 + $0x10] sm:$0xf]
    %v68 = vld [vmem:[%s3 + $0x14] sm:$0xf]
    %v69 = vld [vmem:[%s3 + $0x18] sm:$0xf]
    %v70 = vld [vmem:[%s3 + $0x1c] sm:$0xf]
    %v71 = vld [vmem:[%s4] sm:$0x1]
    %v73 = vperm.slane %v71, 0
    %v83 = vunpack.c.l.b16 %v63
    %v84 = vunpack.c.l.b16 %v64
    %v85 = vunpack.c.l.b16 %v65
    %v86 = vunpack.c.l.b16 %v66
    %v87 = vunpack.c.l.b16 %v67
    %v88 = vunpack.c.l.b16 %v68
    %v89 = vunpack.c.l.b16 %v69
    %v90 = vunpack.c.l.b16 %v70
    %v91 = vpack.c.b16 %v84, %v83
    %v92 = vpack.c.b16 %v86, %v85
    %v93 = vpack.c.b16 %v88, %v87
    %v94 = vpack.c.b16 %v90, %v89
    %vm99 = vcmask 523264
    %v101 = vsel %vm99, %v62, 0
    %103 = vmatpush.bf16.msra.mxu0 0
    %104 = vmatpush.bf16.msra.mxu0 0
    %105 = vmatpush.bf16.msra.mxu0 0
    %106 = vmatpush.bf16.msra.mxu0 0
    %107 = vmatpush.bf16.msra.mxu0 %v94
    %108 = vmatpush.bf16.msra.mxu0 %v93
    %109 = vmatpush.bf16.msra.mxu0 %v92
    %110 = vmatpush.bf16.msra.mxu0 %v91
    %111 = vmatmul.bf16.gmra.mxu0 %v101
    %v112 = vpop.f32.mrf.mxu0
    %v113 = vadd.f32 %v73, %v112
    %v114 = vpop.f32.mrf.mxu0
    %115 = vdwg.mxu0
    %vm116 = vcmask 64512
    %117 = vst.msk [vmem:[#allocation2] sm:$0xff] %vm116, %v113
    // Predicated region
    $region22: #{tpu_custom_call.1} parent=1 // pred_check
      _
    $region23: #{tpu_custom_call.1} parent=1 // pred_check_branch
      %119 = sbr.rel (0) target = $region25
    $region24: #{tpu_custom_call.1} parent=1 // pred_region
      %121 = vsyncadd [#allocation3], 0
      %s123 = sshll.u32 [#allocation2], 4
      %s124 = int_to_ptr.vmem [resolvable:$true] %s123
      %s125 = sshll.u32 %s5, 4
      %s126 = int_to_ptr.hbm [resolvable:$true] %s125
      %128 = dma.vmem_to_hbm [thread:$0]  %s124, 128, %s126, [#allocation3]
    $region25: #{tpu_custom_call.1} parent=1 // pred_fallthru
      _
    // Predicated region
    $region26: #{tpu_custom_call.1} parent=1 // pred_check
      _
    $region27: #{tpu_custom_call.1} parent=1 // pred_check_branch
      %130 = sbr.rel (0) target = $region29
    $region28: #{tpu_custom_call.1} parent=1 // pred_region
      %132 = dma.done [#allocation3], 128
    $region29: #{tpu_custom_call.1} parent=1 // pred_fallthru
      _
    %133 = vsyncpa [#allocation3], 1

</llo_original>
